<compile_context>
chip_gen: v6e
topology: v6e:2x2x1
jax: 0.10.0
libtpu: 0.0.40
codegen_flags: <defaults>
</compile_context>

<pallas_src>
import functools
import math

import jax
import jax.numpy as jnp
from jax.experimental import pallas as pl
from jax.experimental.pallas import tpu as pltpu


def _round_up(a, b):
    return ((a + b - 1) // b) * b


def _linear_kernel(x_ref, w_ref, b_ref, o_ref, *, apply_relu):
    # x_ref: (tm, K)  w_ref: (K, N)  b_ref: (1, N)  o_ref: (tm, N)
    acc = jnp.dot(x_ref[...], w_ref[...], preferred_element_type=jnp.float32)
    acc = acc + b_ref[...].astype(jnp.float32)
    if apply_relu:
        acc = jnp.maximum(acc, 0.0)
    o_ref[...] = acc.astype(o_ref.dtype)


def linear_pallas(x, w, b, *, apply_relu, tm):
    """Fused (M,K)@(K,N) + bias (+ReLU). M must be a multiple of tm."""
    M, K = x.shape
    Kw, N = w.shape
    assert K == Kw and M % tm == 0, (x.shape, w.shape, tm)

    bpe_x = x.dtype.itemsize
    bpe_w = w.dtype.itemsize
    cost = pl.CostEstimate(
        flops=2 * M * K * N,
        transcendentals=0,
        bytes_accessed=(M * K * bpe_x + K * N * bpe_w
                        + N * b.dtype.itemsize + M * N * bpe_x),
    )

    kernel = functools.partial(_linear_kernel, apply_relu=apply_relu)
    return pl.pallas_call(
        kernel,
        out_shape=jax.ShapeDtypeStruct((M, N), x.dtype),
        grid_spec=pltpu.PrefetchScalarGridSpec(
            num_scalar_prefetch=0,
            grid=(pl.cdiv(M, tm),),
            in_specs=[
                pl.BlockSpec((tm, K), lambda i: (i, 0)),   # streamed row tiles
                pl.BlockSpec((K, N), lambda i: (0, 0)),    # weight, VMEM resident
                pl.BlockSpec((1, N), lambda i: (0, 0)),    # bias row
            ],
            out_specs=pl.BlockSpec((tm, N), lambda i: (i, 0)),
        ),
        compiler_params=pltpu.CompilerParams(
            dimension_semantics=("parallel",),             # megacore shards row tiles
        ),
        cost_estimate=cost,
    )(x, w, b)


def _pick_tm(M, max_feat, itemsize, *, tm_max=512,
             vmem_budget=20 * 1024 * 1024):
    """Largest row tile (<= tm_max, multiple of 8) whose working set fits VMEM."""
    tm = max(8, min(tm_max, _round_up(M, 8)))
    tm = _round_up(tm, 8)
    fixed = 2 * (max_feat * max_feat + max_feat) * itemsize   # weight + bias buffers
    while tm > 8 and fixed + 4 * tm * max_feat * itemsize > vmem_budget:
        tm = max(8, tm // 2)
    return tm


def mlp_forward(x, weights, biases, *, tm_max=512, compute_dtype=None):
    """Forward of the PyTorch MLP.

    weights[l]: (out_l, in_l)  (nn.Linear layout), biases[l]: (out_l,)
    x: (..., in_dim)  ->  (..., out_dim)
    """
    lead_shape = x.shape[:-1]
    in_dim = x.shape[-1]
    M = math.prod(lead_shape) if lead_shape else 1
    out_dtype = x.dtype

    h = x.reshape(M, in_dim)
    if compute_dtype is not None:
        h = h.astype(compute_dtype)   # bf16 streaming option; accum stays f32 in-kernel

    # Lane-dense feature padding (multiples of 128) for unmasked vector stores/loads.
    padded_dims = [_round_up(in_dim, 128)] + [
        _round_up(w.shape[0], 128) for w in weights]
    itemsize = jnp.dtype(compute_dtype if compute_dtype is not None else x.dtype).itemsize
    tm = _pick_tm(M, max(padded_dims), itemsize, tm_max=tm_max)
    Mp = _round_up(M, tm)

    Kp = padded_dims[0]
    if (Mp, Kp) != (M, in_dim):
        h = jnp.pad(h, ((0, Mp - M), (0, Kp - in_dim)))

    n_layers = len(weights)
    out_dim = weights[-1].shape[0]
    for l, (w, b) in enumerate(zip(weights, biases)):
        o_l, k_l = w.shape
        Np = padded_dims[l + 1]
        wt = w.T                                   # (k_l, o_l)
        if (Kp, Np) != (k_l, o_l):
            wt = jnp.pad(wt, ((0, Kp - k_l), (0, Np - o_l)))
        if compute_dtype is not None:
            wt = wt.astype(compute_dtype)
        b_row = b.astype(jnp.float32)
        if Np != o_l:
            b_row = jnp.pad(b_row, (0, Np - o_l))
        b_row = b_row.reshape(1, Np)
        # Padded hidden columns stay exactly zero (zero pad weights/bias, ReLU(0)=0),
        # so they never affect later layers; padded rows are sliced off at the end.
        h = linear_pallas(h, wt, b_row, apply_relu=(l < n_layers - 1), tm=tm)
        Kp = Np

    # TODO(synk): for very large out_dim/hidden (weight tile > VMEM) add an N-tile grid axis.
    out = h[:M, :out_dim].astype(out_dtype)
    return out.reshape(*lead_shape, out_dim)


def mlp_reference(x, weights, biases):
    lead_shape = x.shape[:-1]
    h = x.reshape(-1, x.shape[-1])
    for l, (w, b) in enumerate(zip(weights, biases)):
        h = jnp.dot(h, w.T, preferred_element_type=jnp.float32) + b
        if l < len(weights) - 1:
            h = jnp.maximum(h, 0.0)
    return h.reshape(*lead_shape, h.shape[-1]).astype(x.dtype)


if __name__ == "__main__":
    # Small shapes consistent with the module's forward: x (..., in_dim).
    batch, seq, in_dim = 2, 8, 16
    hidden_list = [32, 32]
    out_dim = 24

    key = jax.random.PRNGKey(0)
    keys = jax.random.split(key, 1 + 2 * (len(hidden_list) + 1))
    kx, param_keys = keys[0], keys[1:]

    x = jax.random.normal(kx, (batch, seq, in_dim), dtype=jnp.float32)

    dims = [in_dim] + hidden_list + [out_dim]
    weights, biases = [], []
    for l in range(len(dims) - 1):
        fan_in, fan_out = dims[l], dims[l + 1]
        kw, kb = param_keys[2 * l], param_keys[2 * l + 1]
        weights.append(
            jax.random.normal(kw, (fan_out, fan_in), dtype=jnp.float32)
            / jnp.sqrt(fan_in))
        biases.append(
            jax.random.normal(kb, (fan_out,), dtype=jnp.float32) * 0.01)

    out = mlp_forward(x, weights, biases)
    out = jax.block_until_ready(out)

    ref = mlp_reference(x, weights, biases)
    assert out.shape == (batch, seq, out_dim), out.shape
    assert jnp.allclose(out, ref, atol=1e-3, rtol=1e-3), \
        float(jnp.max(jnp.abs(out - ref)))
    print("KERNEL_OK")
</pallas_src>

<mosaic_0001>
module attributes {stable_mosaic.version = 11 : i64} {
  func.func @_linear_kernel(%arg0: i32, %arg1: memref<16x128xf32, #tpu.memory_space<vmem>>, %arg2: memref<128x128xf32, #tpu.memory_space<vmem>>, %arg3: memref<1x128xf32, #tpu.memory_space<vmem>>, %arg4: memref<16x128xf32, #tpu.memory_space<vmem>>) attributes {dimension_semantics = [#tpu.dimension_semantics<parallel>], iteration_bounds = array<i64: 1>, scalar_prefetch = 0 : i64, scratch_operands = 0 : i64, tpu.core_type = #tpu.core_type<tc>, window_params = [{transform_indices = @transform_0, window_bounds = array<i64: 16, 128>}, {pipeline_mode = #tpu.pipeline_mode<synchronous>, transform_indices = @transform_1, window_bounds = array<i64: 128, 128>}, {pipeline_mode = #tpu.pipeline_mode<synchronous>, transform_indices = @transform_2, window_bounds = array<i64: 1, 128>}, {transform_indices = @transform_3, window_bounds = array<i64: 16, 128>}]} {
    %c0 = arith.constant 0 : index
    %c0_0 = arith.constant 0 : index
    %0 = vector.load %arg1[%c0, %c0_0] : memref<16x128xf32, #tpu.memory_space<vmem>>, vector<16x128xf32>
    %c0_1 = arith.constant 0 : index
    %c0_2 = arith.constant 0 : index
    %1 = vector.load %arg2[%c0_1, %c0_2] : memref<128x128xf32, #tpu.memory_space<vmem>>, vector<128x128xf32>
    %cst = arith.constant dense<0.000000e+00> : vector<16x128xf32>
    %2 = tpu.matmul %0, %1, %cst {dimension_numbers = #tpu.dot_dimension_numbers<[1], [0], [0], [1], [0, 0, 1, 1], [], []>} : vector<16x128xf32>, vector<128x128xf32>, vector<16x128xf32> -> vector<16x128xf32>
    %c0_3 = arith.constant 0 : index
    %c0_4 = arith.constant 0 : index
    %3 = vector.load %arg3[%c0_3, %c0_4] : memref<1x128xf32, #tpu.memory_space<vmem>>, vector<1x128xf32>
    %4 = vector.broadcast %3 : vector<1x128xf32> to vector<16x128xf32>
    %5 = arith.addf %2, %4 : vector<16x128xf32>
    %cst_5 = arith.constant 0.000000e+00 : f32
    %6 = vector.broadcast %cst_5 : f32 to vector<16x128xf32>
    %7 = arith.maximumf %5, %6 : vector<16x128xf32>
    %c0_6 = arith.constant 0 : index
    %c0_7 = arith.constant 0 : index
    %8 = vector.load %arg4[%c0_6, %c0_7] : memref<16x128xf32, #tpu.memory_space<vmem>>, vector<16x128xf32>
    tpu.vector_store %arg4[%c0_6, %c0_7], %7 {strides = array<i32>} : memref<16x128xf32, #tpu.memory_space<vmem>>, vector<16x128xf32>,
    return
  }
  func.func @transform_0(%arg0: i32) -> (i32, i32) {
    %c0_i32 = arith.constant 0 : i32
    %c0_i32_0 = arith.constant 0 : i32
    return %arg0, %c0_i32 : i32, i32
  }
  func.func @transform_1(%arg0: i32) -> (i32, i32) {
    %c0_i32 = arith.constant 0 : i32
    %c0_i32_0 = arith.constant 0 : i32
    %c0_i32_1 = arith.constant 0 : i32
    return %c0_i32, %c0_i32_0 : i32, i32
  }
  func.func @transform_2(%arg0: i32) -> (i32, i32) {
    %c0_i32 = arith.constant 0 : i32
    %c0_i32_0 = arith.constant 0 : i32
    %c0_i32_1 = arith.constant 0 : i32
    return %c0_i32, %c0_i32_0 : i32, i32
  }
  func.func @transform_3(%arg0: i32) -> (i32, i32) {
    %c0_i32 = arith.constant 0 : i32
    %c0_i32_0 = arith.constant 0 : i32
    return %arg0, %c0_i32 : i32, i32
  }
}

</mosaic_0001>

<llo_original>
// kernel: tpu_custom_call.1
$region0: #{tpu_custom_call.1}
  #allocation0 [shape = 'u32[]', space=smem, size = 0x4, offset = 0x4, fixed_abs, tag = 'smem constant byte address 0x4 - core index']
  #allocation1 [shape = 'u32[144,128]{1,0:T(1,128)}', space=vmem, size = 0x12000, scoped, tag = 'internal scratch']
  %s0 = inlined_call_operand.hbm [shape: f32[16,128], index: 0, kind: input, shape index: {}]
  %s1 = inlined_call_operand.hbm [shape: f32[128,128], index: 1, kind: input, shape index: {}]
  %s2 = inlined_call_operand.vmem [shape: f32[1,128], index: 2, kind: input, shape index: {}]
  %s3 = inlined_call_operand.hbm [shape: f32[16,128], index: 3, kind: output, shape index: {}]
  %s4 = sld [smem:[#allocation0]]
  $region30: #{tpu_custom_call.1} parent=0
    _
  %s6 = ssub.s32 1, %s4
  %s7 = scalar_select 0, %s6, %s4
  $region1: #{tpu_custom_call.1} parent=0
    #allocation2 [shape = 'u8[8192]{0}', space=vmem, size = 0x2000, scoped, tag = 'input window, operand 0, single buffered']
    #allocation3 [shape = 's32[1]{0}', space=sflag, size = 0x4, scoped, tag = 'scoped memory for tpu_custom_call.1']
    #allocation4 [shape = 's32[1]{0}', space=sflag, size = 0x4, scoped, tag = 'scoped memory for tpu_custom_call.1']
    #allocation5 [shape = 'u8[65536]{0}', space=vmem, size = 0x10000, scoped, tag = 'input window, operand 1, single buffered']
    #allocation6 [shape = 's32[1]{0}', space=sflag, size = 0x4, scoped, tag = 'scoped memory for tpu_custom_call.1']
    #allocation7 [shape = 'u8[8192]{0}', space=vmem, size = 0x2000, scoped, tag = 'output window, operand 0, single buffered']
    %8 = vsyncpa [#allocation3], 0
    %9 = vsyncpa [#allocation6], 0
    %10 = vsyncpa [#allocation4], 0
    // Predicated region
    $region2: #{tpu_custom_call.1} parent=1 // pred_check
      _
    $region3: #{tpu_custom_call.1} parent=1 // pred_check_branch
      %12 = sbr.rel (0) target = $region5
    $region4: #{tpu_custom_call.1} parent=1 // pred_region
      %s14 = ssub.s32 256, 256
      %15 = vsyncadd [#allocation3], %s14
      %s16 = sshll.u32 [#allocation2], 4
      %s17 = int_to_ptr.vmem [resolvable:$true] %s16
      %22 = dma.hbm_to_vmem [thread:$0]  %s0, 256, %s17, [#allocation3], 128, 128, 8
    $region5: #{tpu_custom_call.1} parent=1 // pred_fallthru
      _
    // Predicated region
    $region6: #{tpu_custom_call.1} parent=1 // pred_check
      _
    $region7: #{tpu_custom_call.1} parent=1 // pred_check_branch
      %24 = sbr.rel (0) target = $region9
    $region8: #{tpu_custom_call.1} parent=1 // pred_region
      %s26 = ssub.s32 2048, 2048
      %27 = vsyncadd [#allocation6], %s26
      %s28 = sshll.u32 [#allocation5], 4
      %s29 = int_to_ptr.vmem [resolvable:$true] %s28
      %34 = dma.hbm_to_vmem [thread:$0]  %s1, 2048, %s29, [#allocation6], 128, 128, 8
    $region9: #{tpu_custom_call.1} parent=1 // pred_fallthru
      _
    // Predicated region
    $region10: #{tpu_custom_call.1} parent=1 // pred_check
      _
    $region11: #{tpu_custom_call.1} parent=1 // pred_check_branch
      %36 = sbr.rel (0) target = $region13
    $region12: #{tpu_custom_call.1} parent=1 // pred_region
      _
    $region13: #{tpu_custom_call.1} parent=1 // pred_fallthru
      _
    // Predicated region
    $region14: #{tpu_custom_call.1} parent=1 // pred_check
      _
    $region15: #{tpu_custom_call.1} parent=1 // pred_check_branch
      %38 = sbr.rel (0) target = $region17
    $region16: #{tpu_custom_call.1} parent=1 // pred_region
      %39 = dma.done [#allocation3], 256
    $region17: #{tpu_custom_call.1} parent=1 // pred_fallthru
      _
    // Predicated region
    $region18: #{tpu_custom_call.1} parent=1 // pred_check
      _
    $region19: #{tpu_custom_call.1} parent=1 // pred_check_branch
      %41 = sbr.rel (0) target = $region21
    $region20: #{tpu_custom_call.1} parent=1 // pred_region
      %42 = dma.done [#allocation6], 2048
    $region21: #{tpu_custom_call.1} parent=1 // pred_fallthru
      _
    %v43 = vld [vmem:[#allocation2] sm:$0xff]
    %v44 = vld [vmem:[#allocation2 + $0x8] sm:$0xff]
    %v45 = vld [vmem:[#allocation5] sm:$0xff]
    %v46 = vld [vmem:[#allocation5 + $0x8] sm:$0xff]
    %v47 = vld [vmem:[#allocation5 + $0x10] sm:$0xff]
    %v48 = vld [vmem:[#allocation5 + $0x18] sm:$0xff]
    %v49 = vld [vmem:[#allocation5 + $0x20] sm:$0xff]
    %v50 = vld [vmem:[#allocation5 + $0x28] sm:$0xff]
    %v51 = vld [vmem:[#allocation5 + $0x30] sm:$0xff]
    %v52 = vld [vmem:[#allocation5 + $0x38] sm:$0xff]
    %v53 = vld [vmem:[#allocation5 + $0x40] sm:$0xff]
    %v54 = vld [vmem:[#allocation5 + $0x48] sm:$0xff]
    %v55 = vld [vmem:[#allocation5 + $0x50] sm:$0xff]
    %v56 = vld [vmem:[#allocation5 + $0x58] sm:$0xff]
    %v57 = vld [vmem:[#allocation5 + $0x60] sm:$0xff]
    %v58 = vld [vmem:[#allocation5 + $0x68] sm:$0xff]
    %v59 = vld [vmem:[#allocation5 + $0x70] sm:$0xff]
    %v60 = vld [vmem:[#allocation5 + $0x78] sm:$0xff]
    %v61 = vld [vmem:[%s2] sm:$0x1]
    %v63 = vlaneseq
    %v64 = vshrl.u32 %v63, 7
    %v65 = vsub.s32 0, %v64
    %v66 = vrot.slane %v61, %v65
    %68 = vmatprep.subr.mxu0 0.0
    %69 = vmatpush1.msra.mxu0 %v60
    %70 = vmatprep.subr.mxu0 0.0
    %71 = vmatpush1.msra.mxu0 %v59
    %72 = vmatprep.subr.mxu0 0.0
    %73 = vmatpush1.msra.mxu0 %v58
    %74 = vmatprep.subr.mxu0 0.0
    %75 = vmatpush1.msra.mxu0 %v57
    %76 = vmatprep.subr.mxu0 0.0
    %77 = vmatpush1.msra.mxu0 %v56
    %78 = vmatprep.subr.mxu0 0.0
    %79 = vmatpush1.msra.mxu0 %v55
    %80 = vmatprep.subr.mxu0 0.0
    %81 = vmatpush1.msra.mxu0 %v54
    %82 = vmatprep.subr.mxu0 0.0
    %83 = vmatpush1.msra.mxu0 %v53
    %84 = vmatprep.subr.mxu0 0.0
    %85 = vmatpush1.msra.mxu0 %v52
    %86 = vmatprep.subr.mxu0 0.0
    %87 = vmatpush1.msra.mxu0 %v51
    %88 = vmatprep.subr.mxu0 0.0
    %89 = vmatpush1.msra.mxu0 %v50
    %90 = vmatprep.subr.mxu0 0.0
    %91 = vmatpush1.msra.mxu0 %v49
    %92 = vmatprep.subr.mxu0 0.0
    %93 = vmatpush1.msra.mxu0 %v48
    %94 = vmatprep.subr.mxu0 0.0
    %95 = vmatpush1.msra.mxu0 %v47
    %96 = vmatprep.subr.mxu0 0.0
    %97 = vmatpush1.msra.mxu0 %v46
    %98 = vmatprep.subr.mxu0 0.0
    %99 = vmatpush1.msra.mxu0 %v45
    %100 = vmatprep.subr.mxu0 0.0
    %101 = vmatpush2.msra.mxu0 0.0
    %102 = vmatprep.subr.mxu0 0.0
    %103 = vmatpush2.msra.mxu0 0.0
    %104 = vmatprep.subr.mxu0 0.0
    %105 = vmatpush2.msra.mxu0 0.0
    %106 = vmatprep.subr.mxu0 0.0
    %107 = vmatpush2.msra.mxu0 0.0
    %108 = vmatprep.subr.mxu0 0.0
    %109 = vmatpush2.msra.mxu0 0.0
    %110 = vmatprep.subr.mxu0 0.0
    %111 = vmatpush2.msra.mxu0 0.0
    %112 = vmatprep.subr.mxu0 0.0
    %113 = vmatpush2.msra.mxu0 0.0
    %114 = vmatprep.subr.mxu0 0.0
    %115 = vmatpush2.msra.mxu0 0.0
    %116 = vmatprep.subr.mxu0 0.0
    %117 = vmatpush2.msra.mxu0 0.0
    %118 = vmatprep.subr.mxu0 0.0
    %119 = vmatpush2.msra.mxu0 0.0
    %120 = vmatprep.subr.mxu0 0.0
    %121 = vmatpush2.msra.mxu0 0.0
    %122 = vmatprep.subr.mxu0 0.0
    %123 = vmatpush2.msra.mxu0 0.0
    %124 = vmatprep.subr.mxu0 0.0
    %125 = vmatpush2.msra.mxu0 0.0
    %126 = vmatprep.subr.mxu0 0.0
    %127 = vmatpush2.msra.mxu0 0.0
    %128 = vmatprep.subr.mxu0 0.0
    %129 = vmatpush2.msra.mxu0 0.0
    %130 = vmatprep.subr.mxu0 0.0
    %131 = vmatpush2.msra.mxu0 0.0
    %132 = vmatprep.mubr.f32.mxu0 0.0
    %133 = vmatmul.mubr.f32.gmra.mxu0 %v43
    %v134 = vpop.f32.mrf.mxu0
    %v135 = vadd.f32 %v66, %v134
    %v136 = vpop.f32.mrf.mxu0
    %137 = vmatprep.mubr.f32.mxu0 0.0
    %138 = vmatmul.mubr.f32.gmra.mxu0 %v44
    %v139 = vpop.f32.mrf.mxu0
    %v140 = vadd.f32 %v66, %v139
    %v141 = vpop.f32.mrf.mxu0
    %142 = vdwg.mxu0
    %v143 = vmax.f32 %v135, 0.0
    %v144 = vmax.f32 %v140, 0.0
    %145 = vst [vmem:[#allocation7] sm:$0xff] %v143
    %146 = vst [vmem:[#allocation7 + $0x8] sm:$0xff] %v144
    // Predicated region
    $region22: #{tpu_custom_call.1} parent=1 // pred_check
      _
    $region23: #{tpu_custom_call.1} parent=1 // pred_check_branch
      %148 = sbr.rel (0) target = $region25
    $region24: #{tpu_custom_call.1} parent=1 // pred_region
      %s150 = ssub.s32 256, 256
      %151 = vsyncadd [#allocation4], %s150
      %s152 = sshll.u32 [#allocation7], 4
      %s153 = int_to_ptr.vmem [resolvable:$true] %s152
      %158 = dma.vmem_to_hbm [thread:$0]  %s153, 256, %s3, [#allocation4], 128, 128, 8
    $region25: #{tpu_custom_call.1} parent=1 // pred_fallthru
      _
    // Predicated region
    $region26: #{tpu_custom_call.1} parent=1 // pred_check
      _
    $region27: #{tpu_custom_call.1} parent=1 // pred_check_branch
      %160 = sbr.rel (0) target = $region29
    $region28: #{tpu_custom_call.1} parent=1 // pred_region
      %161 = dma.done [#allocation4], 256
    $region29: #{tpu_custom_call.1} parent=1 // pred_fallthru
      _
    %162 = vsyncpa [#allocation3], 1
    %163 = vsyncpa [#allocation6], 1
    %164 = vsyncpa [#allocation4], 1

</llo_original>
